<compile_context>
chip_gen: v5e
topology: v5e:2x2
jax: 0.10.0
libtpu: 0.0.40
codegen_flags: <defaults>
</compile_context>

<pallas_src>
import functools
import math

import jax
import jax.numpy as jnp
from jax.experimental import pallas as pl
from jax.experimental.pallas import tpu as pltpu


def make_positional_encoding(d_model: int, max_len: int = 5000) -> jnp.ndarray:
    """Deterministically build the (max_len, d_model) sin/cos table (f32)."""
    position = jnp.arange(0, max_len, dtype=jnp.float32)[:, None]            # (L, 1)
    div_term = jnp.exp(
        jnp.arange(0, d_model, 2, dtype=jnp.float32) * (-math.log(10000.0) / d_model)
    )                                                                         # (D/2,)
    angles = position * div_term                                              # (L, D/2)
    pe = jnp.zeros((max_len, d_model), dtype=jnp.float32)
    pe = pe.at[:, 0::2].set(jnp.sin(angles))
    pe = pe.at[:, 1::2].set(jnp.cos(angles))
    return pe


def _pe_add_kernel(x_ref, pe_ref, o_ref, *, batch: int, d_model: int):
    # x_ref / o_ref: (tile_s, B*D) lane-dense slab.  pe_ref: (tile_s, D), f32.
    # Load pe once, reuse it for every batch slice (unrolled static offsets).
    # Each slice is D lanes wide starting at b*D; with D % 128 == 0 every
    # load/store is lane-aligned and unmasked.  The add runs in f32 on the VPU;
    # only the store casts to the output dtype.
    pe = pe_ref[...]
    for b in range(batch):
        sl = pl.ds(b * d_model, d_model)
        o_ref[:, sl] = (x_ref[:, sl].astype(jnp.float32) + pe).astype(o_ref.dtype)


def positional_encoding_forward(
    x: jnp.ndarray,
    pe: jnp.ndarray,
    *,
    seq_tile: int | None = None,
    force_pallas: bool = False,
) -> jnp.ndarray:
    """x: (S, B, D), pe: (max_len, D) -> (S, B, D), out = x + pe[:S, None, :]."""
    S, B, D = x.shape
    if S > pe.shape[0]:
        raise ValueError(f"sequence length {S} exceeds max_len {pe.shape[0]}")

    pe_f32 = pe.astype(jnp.float32)
    itemsize = x.dtype.itemsize
    total_bytes = S * B * D * itemsize

    # Plain-JAX fallback:
    #  * D not a multiple of 128 -> masked, lane-wasteful stores in any layout;
    #  * tiny tensors -> fixed pallas_call launch/DMA-setup overhead dominates.
    if D % 128 != 0 or (not force_pallas and total_bytes < (4 << 20)):
        return (x.astype(jnp.float32) + pe_f32[:S, None, :]).astype(x.dtype)

    pe_slice = pe_f32[:S]                    # (S, D) f32 — negligible HBM bytes
    x2 = x.reshape(S, B * D)                 # contiguous reshape, lane-dense slab

    # Sublane packing granularity for the dtype: 8 (f32), 16 (bf16), 32 (i8/fp8).
    sub = max(8, 32 // itemsize)

    if seq_tile is not None:
        tile_s = min(seq_tile, S)
        if tile_s < S:
            tile_s = max(sub, (tile_s // sub) * sub)
    else:
        # Target ~2 MiB per x block: double-buffered in + out blocks plus the
        # tiny pe buffers stay well under v5e's 16 MiB scoped-VMEM default and
        # v7x's 64 MiB physical VMEM.  Force an even step count >= 2 so the
        # "parallel" grid axis load-balances across v7x's two TensorCores.
        target_bytes = 2 << 20
        steps = max(2, pl.cdiv(total_bytes, target_bytes))
        steps += steps % 2
        rows = pl.cdiv(S, steps)
        rows = pl.cdiv(rows, sub) * sub
        tile_s = min(max(sub, rows), S)

    grid = (pl.cdiv(S, tile_s),)

    cost = pl.CostEstimate(
        flops=S * B * D,
        transcendentals=0,
        bytes_accessed=2 * total_bytes + S * D * 4,   # read x, write out, read pe
    )

    out2 = pl.pallas_call(
        functools.partial(_pe_add_kernel, batch=B, d_model=D),
        out_shape=jax.ShapeDtypeStruct((S, B * D), x.dtype),
        grid=grid,
        in_specs=[
            pl.BlockSpec((tile_s, B * D), lambda i: (i, 0)),   # x slab
            pl.BlockSpec((tile_s, D), lambda i: (i, 0)),       # pe rows (f32, tiny)
        ],
        out_specs=pl.BlockSpec((tile_s, B * D), lambda i: (i, 0)),
        compiler_params=pltpu.CompilerParams(
            dimension_semantics=("parallel",),                  # megacore sharding
        ),
        cost_estimate=cost,
    )(x2, pe_slice)

    return out2.reshape(S, B, D)


if __name__ == "__main__":
    key = jax.random.PRNGKey(0)
    k1, k2, k3 = jax.random.split(key, 3)

    # --- Test 1: Pallas path (lane-dense D=128, 2-step parallel grid).
    S1, B1, D1 = 256, 2, 128
    x1 = jax.random.normal(k1, (S1, B1, D1), dtype=jnp.float32)
    pe1 = make_positional_encoding(D1, max_len=512)
    out1 = jax.block_until_ready(
        positional_encoding_forward(x1, pe1, force_pallas=True)
    )
    ref1 = x1 + pe1[:S1][:, None, :]
    assert out1.shape == (S1, B1, D1)
    assert jnp.allclose(out1, ref1, atol=1e-6), "mismatch vs reference (test 1)"

    # --- Test 2: tiny module-consistent shape (seq=8, batch=2, d_model=32)
    #             exercises the plain-JAX fallback (D % 128 != 0 / tiny bytes).
    S2, B2, D2 = 8, 2, 32
    x2 = jax.random.normal(k2, (S2, B2, D2), dtype=jnp.float32)
    pe2 = make_positional_encoding(D2, max_len=64)
    out2 = jax.block_until_ready(positional_encoding_forward(x2, pe2))
    ref2 = x2 + pe2[:S2][:, None, :]
    assert out2.shape == (S2, B2, D2)
    assert jnp.allclose(out2, ref2, atol=1e-6), "mismatch vs reference (test 2)"

    # --- Test 3: bf16 input through the Pallas path (f32 add inside the kernel).
    S3, B3, D3 = 64, 4, 128
    x3 = jax.random.normal(k3, (S3, B3, D3), dtype=jnp.bfloat16)
    pe3 = make_positional_encoding(D3, max_len=128)
    out3 = jax.block_until_ready(
        positional_encoding_forward(x3, pe3, force_pallas=True, seq_tile=32)
    )
    ref3 = (x3.astype(jnp.float32) + pe3[:S3][:, None, :]).astype(jnp.bfloat16)
    assert out3.shape == (S3, B3, D3)
    assert jnp.allclose(
        out3.astype(jnp.float32), ref3.astype(jnp.float32), atol=1e-2
    ), "mismatch vs reference (test 3)"

    print("KERNEL_OK")
</pallas_src>

<mosaic_0001>
module attributes {stable_mosaic.version = 11 : i64} {
  func.func @_pe_add_kernel(%arg0: i32, %arg1: memref<128x256xf32, #tpu.memory_space<vmem>>, %arg2: memref<128x128xf32, #tpu.memory_space<vmem>>, %arg3: memref<128x256xf32, #tpu.memory_space<vmem>>) attributes {dimension_semantics = [#tpu.dimension_semantics<parallel>], iteration_bounds = array<i64: 2>, scalar_prefetch = 0 : i64, scratch_operands = 0 : i64, tpu.core_type = #tpu.core_type<tc>, window_params = [{transform_indices = @transform_0, window_bounds = array<i64: 128, 256>}, {transform_indices = @transform_1, window_bounds = array<i64: 128, 128>}, {transform_indices = @transform_2, window_bounds = array<i64: 128, 256>}]} {
    %c0 = arith.constant 0 : index
    %c0_0 = arith.constant 0 : index
    %0 = vector.load %arg2[%c0, %c0_0] : memref<128x128xf32, #tpu.memory_space<vmem>>, vector<128x128xf32>
    %c0_1 = arith.constant 0 : index
    %c0_2 = arith.constant 0 : index
    %1 = vector.load %arg1[%c0_1, %c0_2] : memref<128x256xf32, #tpu.memory_space<vmem>>, vector<128x128xf32>
    %2 = arith.addf %1, %0 : vector<128x128xf32>
    %c0_3 = arith.constant 0 : index
    %c0_4 = arith.constant 0 : index
    %3 = vector.load %arg3[%c0_3, %c0_4] : memref<128x256xf32, #tpu.memory_space<vmem>>, vector<128x128xf32>
    tpu.vector_store %arg3[%c0_3, %c0_4], %2 {strides = array<i32>} : memref<128x256xf32, #tpu.memory_space<vmem>>, vector<128x128xf32>,
    %c0_5 = arith.constant 0 : index
    %c128 = arith.constant 128 : index
    %4 = vector.load %arg1[%c0_5, %c128] : memref<128x256xf32, #tpu.memory_space<vmem>>, vector<128x128xf32>
    %5 = arith.addf %4, %0 : vector<128x128xf32>
    %c0_6 = arith.constant 0 : index
    %c128_7 = arith.constant 128 : index
    %6 = vector.load %arg3[%c0_6, %c128_7] : memref<128x256xf32, #tpu.memory_space<vmem>>, vector<128x128xf32>
    tpu.vector_store %arg3[%c0_6, %c128_7], %5 {strides = array<i32>} : memref<128x256xf32, #tpu.memory_space<vmem>>, vector<128x128xf32>,
    return
  }
  func.func @transform_0(%arg0: i32) -> (i32, i32) {
    %c0_i32 = arith.constant 0 : i32
    %c0_i32_0 = arith.constant 0 : i32
    return %arg0, %c0_i32 : i32, i32
  }
  func.func @transform_1(%arg0: i32) -> (i32, i32) {
    %c0_i32 = arith.constant 0 : i32
    %c0_i32_0 = arith.constant 0 : i32
    return %arg0, %c0_i32 : i32, i32
  }
  func.func @transform_2(%arg0: i32) -> (i32, i32) {
    %c0_i32 = arith.constant 0 : i32
    %c0_i32_0 = arith.constant 0 : i32
    return %arg0, %c0_i32 : i32, i32
  }
}

</mosaic_0001>

<llo_original>
// kernel: tpu_custom_call.1
$region0: #{tpu_custom_call.1}
  #allocation0 [shape = 'u32[]', space=smem, size = 0x4, offset = 0x4, fixed_abs, tag = 'smem constant byte address 0x4 - core index']
  #allocation1 [shape = 'u32[72,128]{1,0:T(1,128)}', space=vmem, size = 0x9000, scoped, tag = 'internal scratch']
  %s0 = inlined_call_operand.hbm [shape: f32[256,256], index: 0, kind: input, shape index: {}]
  %s1 = inlined_call_operand.hbm [shape: f32[256,128], index: 1, kind: input, shape index: {}]
  %s2 = inlined_call_operand.hbm [shape: f32[256,256], index: 2, kind: output, shape index: {}]
  %s3 = sld [smem:[#allocation0]]
  $region49: #{tpu_custom_call.1} parent=0
    _
  %s5 = ssub.s32 1, %s3
  %s6 = scalar_select 0, %s5, %s3
  $region1: #{tpu_custom_call.1} parent=0
    #allocation2 [shape = 'u8[262144]{0}', space=vmem, size = 0x40000, scoped, tag = 'input window, operand 0']
    #allocation3 [shape = 's32[2]{0}', space=sflag, size = 0x8, scoped, tag = 'scoped memory for tpu_custom_call.1']
    #allocation4 [shape = 's32[2]{0}', space=sflag, size = 0x8, scoped, tag = 'scoped memory for tpu_custom_call.1']
    #allocation5 [shape = 'u8[131072]{0}', space=vmem, size = 0x20000, scoped, tag = 'input window, operand 1']
    #allocation6 [shape = 's32[2]{0}', space=sflag, size = 0x8, scoped, tag = 'scoped memory for tpu_custom_call.1']
    #allocation7 [shape = 'u8[262144]{0}', space=vmem, size = 0x40000, scoped, tag = 'output window, operand 0']
    %7 = vsyncpa [#allocation3], 0
    %s8 = scalar_lea.sflag [#allocation3], 1
    %9 = vsyncpa %s8, 0
    %10 = vsyncpa [#allocation6], 0
    %s11 = scalar_lea.sflag [#allocation6], 1
    %12 = vsyncpa %s11, 0
    %13 = vsyncpa [#allocation4], 0
    %s14 = scalar_lea.sflag [#allocation4], 1
    %15 = vsyncpa %s14, 0
    loop: start=0, step=1, limit=4
    $region2: #{tpu_custom_call.1} parent=1 // loop_pre_header
      _
    $region3: #{tpu_custom_call.1} parent=1 // loop_header
      %s17 = sphi 0, %s21
      %p18 = scmp.ge.s32.totalorder %s17, 4
      %s27 = sphi 0, %s29
      %s30 = sphi 0, %s27
      %s31 = sphi 0, %s30
      %s47 = sphi 0, %s31
      %s53 = sphi 0, %s55
      %s56 = sphi 0, %s53
      %s57 = sphi 0, %s56
      %s73 = sphi 0, %s57
      %s79 = sphi 0, %s81
      %s82 = sphi 0, %s79
      %s83 = sphi 0, %s82
      %s99 = sphi 0, %s83
    $region4: #{tpu_custom_call.1} parent=1 // loop_header_branch
      %20 = sbr.rel (%p18) target = $region8
    $region5: #{tpu_custom_call.1} parent=1 // loop_body
      %s22 = ssub.s32 %s17, 1
      %s23 = ssub.s32 %s17, 2
      %s24 = sadd.s32 %s17, 1
      %s25 = ssub.s32 %s17, %s24
      %p26 = scmp.eq.s32.totalorder %s25, 0
      %s28 = sadd.s32 %s27, 1
      %s29 = scalar_select %p26, %s27, %s28
      %p32 = pneg %p26
      %p33 = scmp.eq.s32.totalorder %s17, 1
      %p34 = por %p32, %p33
      %p35 = scmp.ne.s32.totalorder %s27, %s30
      %p36 = scmp.eq.s32.totalorder %s17, 0
      %p37 = por %p35, %p36
      %p38 = scmp.ne.s32.totalorder %s27, %s30
      %p39 = scmp.eq.s32.totalorder %s22, 1
      %p40 = por %p38, %p39
      %p41 = scmp.ne.s32.totalorder %s30, %s31
      %p42 = scmp.eq.s32.totalorder %s22, 0
      %p43 = por %p41, %p42
      %p44 = scmp.ne.s32.totalorder %s30, %s31
      %p45 = scmp.eq.s32.totalorder %s23, 1
      %p46 = por %p44, %p45
      %p48 = scmp.ne.s32.totalorder %s31, %s47
      %p49 = scmp.eq.s32.totalorder %s23, 0
      %p50 = por %p48, %p49
      %s51 = ssub.s32 %s17, %s24
      %p52 = scmp.eq.s32.totalorder %s51, 0
      %s54 = sadd.s32 %s53, 1
      %s55 = scalar_select %p52, %s53, %s54
      %p58 = pneg %p52
      %p59 = scmp.eq.s32.totalorder %s17, 1
      %p60 = por %p58, %p59
      %p61 = scmp.ne.s32.totalorder %s53, %s56
      %p62 = scmp.eq.s32.totalorder %s17, 0
      %p63 = por %p61, %p62
      %p64 = scmp.ne.s32.totalorder %s53, %s56
      %p65 = scmp.eq.s32.totalorder %s22, 1
      %p66 = por %p64, %p65
      %p67 = scmp.ne.s32.totalorder %s56, %s57
      %p68 = scmp.eq.s32.totalorder %s22, 0
      %p69 = por %p67, %p68
      %p70 = scmp.ne.s32.totalorder %s56, %s57
      %p71 = scmp.eq.s32.totalorder %s23, 1
      %p72 = por %p70, %p71
      %p74 = scmp.ne.s32.totalorder %s57, %s73
      %p75 = scmp.eq.s32.totalorder %s23, 0
      %p76 = por %p74, %p75
      %s77 = ssub.s32 %s17, %s24
      %p78 = scmp.eq.s32.totalorder %s77, 0
      %s80 = sadd.s32 %s79, 1
      %s81 = scalar_select %p78, %s79, %s80
      %p84 = pneg %p78
      %p85 = scmp.eq.s32.totalorder %s17, 1
      %p86 = por %p84, %p85
      %p87 = scmp.ne.s32.totalorder %s79, %s82
      %p88 = scmp.eq.s32.totalorder %s17, 0
      %p89 = por %p87, %p88
      %p90 = scmp.ne.s32.totalorder %s79, %s82
      %p91 = scmp.eq.s32.totalorder %s22, 1
      %p92 = por %p90, %p91
      %p93 = scmp.ne.s32.totalorder %s82, %s83
      %p94 = scmp.eq.s32.totalorder %s22, 0
      %p95 = por %p93, %p94
      %p96 = scmp.ne.s32.totalorder %s82, %s83
      %p97 = scmp.eq.s32.totalorder %s23, 1
      %p98 = por %p96, %p97
      %p100 = scmp.ne.s32.totalorder %s83, %s99
      %p101 = scmp.eq.s32.totalorder %s23, 0
      %p102 = por %p100, %p101
      %p103 = scmp.le.s32.totalorder 1, %s17
      %p104 = scmp.lt.s32.totalorder %s17, 3
      %p105 = pnand %p103, %p104
      %p106 = pneg %p105
      // Predicated region
      $region9: #{tpu_custom_call.1} parent=5 // pred_check
        _
      $region10: #{tpu_custom_call.1} parent=5 // pred_check_branch
        %108 = sbr.rel (%p105) target = $region12
      $region11: #{tpu_custom_call.1} parent=5 // pred_region
        %s109 = ssub.s32 %s17, 1
      $region12: #{tpu_custom_call.1} parent=5 // pred_fallthru
        _
      %p110 = scmp.lt.s32.totalorder %s17, 2
      // Predicated region
      $region13: #{tpu_custom_call.1} parent=5 // pred_check
        %p111 = pneg %p110
      $region14: #{tpu_custom_call.1} parent=5 // pred_check_branch
        %113 = sbr.rel (%p111) target = $region16
      $region15: #{tpu_custom_call.1} parent=5 // pred_region
        // Predicated region
        $region17: #{tpu_custom_call.1} parent=15 // pred_check
          %p114 = pneg %p37
        $region18: #{tpu_custom_call.1} parent=15 // pred_check_branch
          %116 = sbr.rel (%p114) target = $region20
        $region19: #{tpu_custom_call.1} parent=15 // pred_region
          %s117 = sand.u32 %s27, 1
          %s118 = scalar_lea.sflag [#allocation3], %s117
          %s119 = sand.u32 %s27, 1
          %s120 = smul.addr %s119, 256
          %s121 = scalar_lea.vmem [#allocation2], %s120
          %s122 = smul.u32 16, %s17
          %124 = vsyncadd %s118, 0
          %s125 = smul.addr %s122, 2
          %s126 = smul.addr %s125, 8
          %s127 = scalar_lea.hbm %s0, %s126
          %s128 = sshll.u32 %s127, 4
          %s129 = int_to_ptr.hbm [resolvable:$true] %s128
          %s130 = sshll.u32 %s121, 4
          %s131 = int_to_ptr.vmem [resolvable:$true] %s130
          %136 = dma.hbm_to_vmem [thread:$0]  %s129, 4096, %s131, %s118, 256, 256, 16
        $region20: #{tpu_custom_call.1} parent=15 // pred_fallthru
          _
        // Predicated region
        $region21: #{tpu_custom_call.1} parent=15 // pred_check
          %p137 = pneg %p63
        $region22: #{tpu_custom_call.1} parent=15 // pred_check_branch
          %139 = sbr.rel (%p137) target = $region24
        $region23: #{tpu_custom_call.1} parent=15 // pred_region
          %s140 = sand.u32 %s53, 1
          %s141 = scalar_lea.sflag [#allocation6], %s140
          %s142 = sand.u32 %s53, 1
          %s143 = smul.addr %s142, 128
          %s144 = scalar_lea.vmem [#allocation5], %s143
          %s145 = smul.u32 16, %s17
          %147 = vsyncadd %s141, 0
          %s148 = smul.addr %s145, 8
          %s149 = scalar_lea.hbm %s1, %s148
          %s150 = sshll.u32 %s149, 4
          %s151 = int_to_ptr.hbm [resolvable:$true] %s150
          %s152 = sshll.u32 %s144, 4
          %s153 = int_to_ptr.vmem [resolvable:$true] %s152
          %158 = dma.hbm_to_vmem [thread:$0]  %s151, 2048, %s153, %s141, 128, 128, 8
        $region24: #{tpu_custom_call.1} parent=15 // pred_fallthru
          _
      $region16: #{tpu_custom_call.1} parent=5 // pred_fallthru
        _
      %p159 = scmp.le.s32.totalorder 1, %s17
      %p160 = scmp.lt.s32.totalorder %s17, 3
      %p161 = pnand %p159, %p160
      %p162 = pneg %p161
      // Predicated region
      $region25: #{tpu_custom_call.1} parent=5 // pred_check
        _
      $region26: #{tpu_custom_call.1} parent=5 // pred_check_branch
        %164 = sbr.rel (%p161) target = $region28
      $region27: #{tpu_custom_call.1} parent=5 // pred_region
        %s165 = ssub.s32 %s17, 1
        %s166 = sand.u32 %s30, 1
        %s167 = scalar_lea.sflag [#allocation3], %s166
        %s168 = sand.u32 %s30, 1
        %s169 = smul.addr %s168, 256
        %s170 = scalar_lea.vmem [#allocation2], %s169
        // Predicated region
        $region29: #{tpu_custom_call.1} parent=27 // pred_check
          %p171 = pneg %p43
        $region30: #{tpu_custom_call.1} parent=27 // pred_check_branch
          %173 = sbr.rel (%p171) target = $region32
        $region31: #{tpu_custom_call.1} parent=27 // pred_region
          %175 = dma.done %s167, 4096
        $region32: #{tpu_custom_call.1} parent=27 // pred_fallthru
          _
        %s176 = sand.u32 %s56, 1
        %s177 = scalar_lea.sflag [#allocation6], %s176
        %s178 = sand.u32 %s56, 1
        %s179 = smul.addr %s178, 128
        %s180 = scalar_lea.vmem [#allocation5], %s179
        // Predicated region
        $region33: #{tpu_custom_call.1} parent=27 // pred_check
          %p181 = pneg %p69
        $region34: #{tpu_custom_call.1} parent=27 // pred_check_branch
          %183 = sbr.rel (%p181) target = $region36
        $region35: #{tpu_custom_call.1} parent=27 // pred_region
          %185 = dma.done %s177, 2048
        $region36: #{tpu_custom_call.1} parent=27 // pred_fallthru
          _
        %s186 = sand.u32 %s30, 1
        %s187 = scalar_lea.sflag [#allocation3], %s186
        %s188 = sand.u32 %s30, 1
        %s189 = smul.addr %s188, 256
        %s190 = scalar_lea.vmem [#allocation2], %s189
        %p191 = pneg %p43
        %p192 = pneg %p40
        %s193 = sand.u32 %s56, 1
        %s194 = scalar_lea.sflag [#allocation6], %s193
        %s195 = sand.u32 %s56, 1
        %s196 = smul.addr %s195, 128
        %s197 = scalar_lea.vmem [#allocation5], %s196
        %p198 = pneg %p69
        %p199 = pneg %p66
        %p200 = pneg %p95
        %p201 = pneg %p92
        %s202 = sand.u32 %s82, 1
        %s203 = scalar_lea.sflag [#allocation4], %s202
        %s204 = sand.u32 %s82, 1
        %s205 = smul.addr %s204, 256
        %s206 = scalar_lea.vmem [#allocation7], %s205
        %s207 = smul.u32 16, %s22
        %s208 = smul.u32 16, %s22
        %s209 = smul.u32 16, %s22
        %v210 = vld [vmem:[%s180] sm:$0xff]
        %v211 = vld [vmem:[%s180 + $0x8] sm:$0xff]
        %v212 = vld [vmem:[%s180 + $0x10] sm:$0xff]
        %v213 = vld [vmem:[%s180 + $0x18] sm:$0xff]
        %v214 = vld [vmem:[%s180 + $0x20] sm:$0xff]
        %v215 = vld [vmem:[%s180 + $0x28] sm:$0xff]
        %v216 = vld [vmem:[%s180 + $0x30] sm:$0xff]
        %v217 = vld [vmem:[%s180 + $0x38] sm:$0xff]
        %v218 = vld [vmem:[%s180 + $0x40] sm:$0xff]
        %v219 = vld [vmem:[%s180 + $0x48] sm:$0xff]
        %v220 = vld [vmem:[%s180 + $0x50] sm:$0xff]
        %v221 = vld [vmem:[%s180 + $0x58] sm:$0xff]
        %v222 = vld [vmem:[%s180 + $0x60] sm:$0xff]
        %v223 = vld [vmem:[%s180 + $0x68] sm:$0xff]
        %v224 = vld [vmem:[%s180 + $0x70] sm:$0xff]
        %v225 = vld [vmem:[%s180 + $0x78] sm:$0xff]
        %v226 = vld [vmem:[%s170] sm:$0xff]
        %v227 = vld [vmem:[%s170 + $0x10] sm:$0xff]
        %v228 = vld [vmem:[%s170 + $0x20] sm:$0xff]
        %v229 = vld [vmem:[%s170 + $0x30] sm:$0xff]
        %v230 = vld [vmem:[%s170 + $0x40] sm:$0xff]
        %v231 = vld [vmem:[%s170 + $0x50] sm:$0xff]
        %v232 = vld [vmem:[%s170 + $0x60] sm:$0xff]
        %v233 = vld [vmem:[%s170 + $0x70] sm:$0xff]
        %v234 = vld [vmem:[%s170 + $0x80] sm:$0xff]
        %v235 = vld [vmem:[%s170 + $0x90] sm:$0xff]
        %v236 = vld [vmem:[%s170 + $0xa0] sm:$0xff]
        %v237 = vld [vmem:[%s170 + $0xb0] sm:$0xff]
        %v238 = vld [vmem:[%s170 + $0xc0] sm:$0xff]
        %v239 = vld [vmem:[%s170 + $0xd0] sm:$0xff]
        %v240 = vld [vmem:[%s170 + $0xe0] sm:$0xff]
        %v241 = vld [vmem:[%s170 + $0xf0] sm:$0xff]
        %v242 = vadd.f32 %v226, %v210
        %v243 = vadd.f32 %v227, %v211
        %v244 = vadd.f32 %v228, %v212
        %v245 = vadd.f32 %v229, %v213
        %v246 = vadd.f32 %v230, %v214
        %v247 = vadd.f32 %v231, %v215
        %v248 = vadd.f32 %v232, %v216
        %v249 = vadd.f32 %v233, %v217
        %v250 = vadd.f32 %v234, %v218
        %v251 = vadd.f32 %v235, %v219
        %v252 = vadd.f32 %v236, %v220
        %v253 = vadd.f32 %v237, %v221
        %v254 = vadd.f32 %v238, %v222
        %v255 = vadd.f32 %v239, %v223
        %v256 = vadd.f32 %v240, %v224
        %v257 = vadd.f32 %v241, %v225
        %258 = vst [vmem:[%s206] sm:$0xff] %v242
        %259 = vst [vmem:[%s206 + $0x10] sm:$0xff] %v243
        %260 = vst [vmem:[%s206 + $0x20] sm:$0xff] %v244
        %261 = vst [vmem:[%s206 + $0x30] sm:$0xff] %v245
        %262 = vst [vmem:[%s206 + $0x40] sm:$0xff] %v246
        %263 = vst [vmem:[%s206 + $0x50] sm:$0xff] %v247
        %264 = vst [vmem:[%s206 + $0x60] sm:$0xff] %v248
        %265 = vst [vmem:[%s206 + $0x70] sm:$0xff] %v249
        %266 = vst [vmem:[%s206 + $0x80] sm:$0xff] %v250
        %267 = vst [vmem:[%s206 + $0x90] sm:$0xff] %v251
        %268 = vst [vmem:[%s206 + $0xa0] sm:$0xff] %v252
        %269 = vst [vmem:[%s206 + $0xb0] sm:$0xff] %v253
        %270 = vst [vmem:[%s206 + $0xc0] sm:$0xff] %v254
        %271 = vst [vmem:[%s206 + $0xd0] sm:$0xff] %v255
        %272 = vst [vmem:[%s206 + $0xe0] sm:$0xff] %v256
        %273 = vst [vmem:[%s206 + $0xf0] sm:$0xff] %v257
        %v274 = vld [vmem:[%s170 + $0x8] sm:$0xff]
        %v275 = vld [vmem:[%s170 + $0x18] sm:$0xff]
        %v276 = vld [vmem:[%s170 + $0x28] sm:$0xff]
        %v277 = vld [vmem:[%s170 + $0x38] sm:$0xff]
        %v278 = vld [vmem:[%s170 + $0x48] sm:$0xff]
        %v279 = vld [vmem:[%s170 + $0x58] sm:$0xff]
        %v280 = vld [vmem:[%s170 + $0x68] sm:$0xff]
        %v281 = vld [vmem:[%s170 + $0x78] sm:$0xff]
        %v282 = vld [vmem:[%s170 + $0x88] sm:$0xff]
        %v283 = vld [vmem:[%s170 + $0x98] sm:$0xff]
        %v284 = vld [vmem:[%s170 + $0xa8] sm:$0xff]
        %v285 = vld [vmem:[%s170 + $0xb8] sm:$0xff]
        %v286 = vld [vmem:[%s170 + $0xc8] sm:$0xff]
        %v287 = vld [vmem:[%s170 + $0xd8] sm:$0xff]
        %v288 = vld [vmem:[%s170 + $0xe8] sm:$0xff]
        %v289 = vld [vmem:[%s170 + $0xf8] sm:$0xff]
        %v290 = vadd.f32 %v274, %v210
        %v291 = vadd.f32 %v275, %v211
        %v292 = vadd.f32 %v276, %v212
        %v293 = vadd.f32 %v277, %v213
        %v294 = vadd.f32 %v278, %v214
        %v295 = vadd.f32 %v279, %v215
        %v296 = vadd.f32 %v280, %v216
        %v297 = vadd.f32 %v281, %v217
        %v298 = vadd.f32 %v282, %v218
        %v299 = vadd.f32 %v283, %v219
        %v300 = vadd.f32 %v284, %v220
        %v301 = vadd.f32 %v285, %v221
        %v302 = vadd.f32 %v286, %v222
        %v303 = vadd.f32 %v287, %v223
        %v304 = vadd.f32 %v288, %v224
        %v305 = vadd.f32 %v289, %v225
        %306 = vst [vmem:[%s206 + $0x8] sm:$0xff] %v290
        %307 = vst [vmem:[%s206 + $0x18] sm:$0xff] %v291
        %308 = vst [vmem:[%s206 + $0x28] sm:$0xff] %v292
        %309 = vst [vmem:[%s206 + $0x38] sm:$0xff] %v293
        %310 = vst [vmem:[%s206 + $0x48] sm:$0xff] %v294
        %311 = vst [vmem:[%s206 + $0x58] sm:$0xff] %v295
        %312 = vst [vmem:[%s206 + $0x68] sm:$0xff] %v296
        %313 = vst [vmem:[%s206 + $0x78] sm:$0xff] %v297
        %314 = vst [vmem:[%s206 + $0x88] sm:$0xff] %v298
        %315 = vst [vmem:[%s206 + $0x98] sm:$0xff] %v299
        %316 = vst [vmem:[%s206 + $0xa8] sm:$0xff] %v300
        %317 = vst [vmem:[%s206 + $0xb8] sm:$0xff] %v301
        %318 = vst [vmem:[%s206 + $0xc8] sm:$0xff] %v302
        %319 = vst [vmem:[%s206 + $0xd8] sm:$0xff] %v303
        %320 = vst [vmem:[%s206 + $0xe8] sm:$0xff] %v304
        %321 = vst [vmem:[%s206 + $0xf8] sm:$0xff] %v305
        %s322 = sand.u32 %s82, 1
        %s323 = scalar_lea.sflag [#allocation4], %s322
        %s324 = sand.u32 %s82, 1
        %s325 = smul.addr %s324, 256
        %s326 = scalar_lea.vmem [#allocation7], %s325
        // Predicated region
        $region37: #{tpu_custom_call.1} parent=27 // pred_check
          %p327 = pneg %p92
        $region38: #{tpu_custom_call.1} parent=27 // pred_check_branch
          %329 = sbr.rel (%p327) target = $region40
        $region39: #{tpu_custom_call.1} parent=27 // pred_region
          %s330 = smul.u32 16, %s22
          %332 = vsyncadd %s323, 0
          %s333 = smul.addr %s330, 2
          %s334 = smul.addr %s333, 8
          %s335 = scalar_lea.hbm %s2, %s334
          %s336 = sshll.u32 %s326, 4
          %s337 = int_to_ptr.vmem [resolvable:$true] %s336
          %s338 = sshll.u32 %s335, 4
          %s339 = int_to_ptr.hbm [resolvable:$true] %s338
          %344 = dma.vmem_to_hbm [thread:$0]  %s337, 4096, %s339, %s323, 256, 256, 16
        $region40: #{tpu_custom_call.1} parent=27 // pred_fallthru
          _
      $region28: #{tpu_custom_call.1} parent=5 // pred_fallthru
        _
      %p345 = scmp.le.s32.totalorder 2, %s17
      // Predicated region
      $region41: #{tpu_custom_call.1} parent=5 // pred_check
        %p346 = pneg %p345
      $region42: #{tpu_custom_call.1} parent=5 // pred_check_branch
        %348 = sbr.rel (%p346) target = $region44
      $region43: #{tpu_custom_call.1} parent=5 // pred_region
        %s349 = ssub.s32 %s17, 2
        // Predicated region
        $region45: #{tpu_custom_call.1} parent=43 // pred_check
          %p350 = pneg %p98
        $region46: #{tpu_custom_call.1} parent=43 // pred_check_branch
          %352 = sbr.rel (%p350) target = $region48
        $region47: #{tpu_custom_call.1} parent=43 // pred_region
          %s353 = sand.u32 %s83, 1
          %s354 = scalar_lea.sflag [#allocation4], %s353
          %s355 = sand.u32 %s83, 1
          %s356 = smul.addr %s355, 256
          %s357 = scalar_lea.vmem [#allocation7], %s356
          %359 = dma.done %s354, 4096
        $region48: #{tpu_custom_call.1} parent=43 // pred_fallthru
          _
      $region44: #{tpu_custom_call.1} parent=5 // pred_fallthru
        _
    $region6: #{tpu_custom_call.1} parent=1 // loop_footer
      %s21 = sadd.s32 1, %s17
    $region7: #{tpu_custom_call.1} parent=1 // loop_footer_branch
      %16 = sbr.rel target = $region3
    $region8: #{tpu_custom_call.1} parent=1 // loop_exit
      _
    %360 = vsyncpa [#allocation3], 1
    %s361 = scalar_lea.sflag [#allocation3], 1
    %362 = vsyncpa %s361, 1
    %363 = vsyncpa [#allocation6], 1
    %s364 = scalar_lea.sflag [#allocation6], 1
    %365 = vsyncpa %s364, 1
    %366 = vsyncpa [#allocation4], 1
    %s367 = scalar_lea.sflag [#allocation4], 1
    %368 = vsyncpa %s367, 1

</llo_original>
